<compile_context>
chip_gen: v7x
topology: tpu7x:2x2x1
jax: 0.10.0
libtpu: 0.0.40
codegen_flags: <defaults>
</compile_context>

<pallas_src>
import functools
from collections import namedtuple

import jax
import jax.numpy as jnp
from jax.experimental import pallas as pl
from jax.experimental.pallas import tpu as pltpu

_LANE = 128
_SLAB = 128               # rows per inner-loop slab (bounds unrolled code per step)
_MAX_COL_TILE = 8192      # lanes per input tile (multiple of 128)
_PACK_COLS_MAX = 512      # below this many cols, use the packed (MXU) path
_PACK_MAX_LANES = 2048    # target packed row width (lanes)
_PACK_MAX_FACTOR = 256    # bound on rows packed per lane-row (bounds ones matrix)

_TPUConfig = namedtuple(
    "_TPUConfig",
    ["vmem_limit", "input_budget", "max_row_tile", "small_bytes", "num_cores"],
)


def _round_up(x, m):
    return ((x + m - 1) // m) * m


@functools.lru_cache(maxsize=1)
def _config():
    """Generation-aware budgets. v5e/v6e: 128 MiB VMEM, 1 TC; v7x: 64 MiB, 2 TCs."""
    vmem_bytes = None
    num_cores = 1
    try:
        info = pltpu.get_tpu_info()
        v = getattr(info, "vmem_capacity_bytes", None)
        if v:
            vmem_bytes = int(v)
        for name in ("num_tensorcores", "tensorcore_count", "num_cores",
                     "cores_per_chip"):
            c = getattr(info, name, None)
            if isinstance(c, int) and c > 0:
                num_cores = c
                break
    except Exception:
        pass
    try:
        kind = jax.devices()[0].device_kind.lower()
    except Exception:
        kind = ""
    if vmem_bytes is None:
        if "v7" in kind:
            vmem_bytes = 64 << 20
        elif kind:
            vmem_bytes = 128 << 20
        else:
            vmem_bytes = 64 << 20          # unknown: assume the smallest (v7x-safe)
    if num_cores == 1 and "v7" in kind:
        num_cores = 2
    num_cores = min(num_cores, 2)          # TensorCores per chip, not slice cores

    if vmem_bytes >= (100 << 20):          # v4/v5e/v6e class (128 MiB VMEM)
        return _TPUConfig(96 << 20, 64 << 20, 2048, 1 << 20, num_cores)
    # v7x class (or unknown): 64 MiB VMEM per TensorCore
    return _TPUConfig(48 << 20, 32 << 20, 2048, 2 << 20, num_cores)


def _choose_row_tile(rows, per_row_bytes, sublane, cfg):
    """Rows per grid step: VMEM-budgeted, sublane-aligned, >=2 blocks on 2-TC chips."""
    max_rows = max(sublane, cfg.input_budget // max(per_row_bytes, 1))
    row_tile = max(sublane, (max_rows // sublane) * sublane)
    row_tile = min(row_tile, cfg.max_row_tile)
    if cfg.num_cores >= 2 and rows >= 2 * sublane:
        # Guarantee >=2 row blocks so the 'parallel' axis shards across TensorCores.
        row_tile = min(row_tile, _round_up(pl.cdiv(rows, cfg.num_cores), sublane))
    row_tile = min(row_tile, rows if rows < sublane else _round_up(rows, sublane))
    # Decompose into fixed-size inner slabs so static code is bounded regardless of
    # how large the (budget-sized) per-step tile is.
    if row_tile >= _SLAB:
        row_tile = (row_tile // _SLAB) * _SLAB
        slab = _SLAB
    else:
        slab = row_tile
    return row_tile, slab, row_tile // slab


# ----------------------------------------------------------------------------------
# Generic path: wide columns.  Grid = (row blocks [parallel], col blocks [arbitrary]).
# ----------------------------------------------------------------------------------
def _gap_kernel(x_ref, o_ref, acc_ref, *, cols, col_tile, inv_cols, needs_mask,
                n_chunks, slab, n_slabs):
    k = pl.program_id(1)
    nk = pl.num_programs(1)

    @pl.when(k == 0)
    def _():
        acc_ref[...] = jnp.zeros_like(acc_ref)

    def _accumulate(masked):
        lane = (jax.lax.broadcasted_iota(jnp.int32, (slab, _LANE), 1)
                if masked else None)

        def slab_body(r0, carry):
            # Slice 128-lane chunks straight off the ref: a fused load-convert-add
            # stream, no (r,c)->(r,c/128,128) relayout and no full-tile f32 temp.
            acc = acc_ref[pl.ds(r0, slab), :]
            for m in range(n_chunks):
                chunk = x_ref[pl.ds(r0, slab),
                              pl.ds(m * _LANE, _LANE)].astype(jnp.float32)
                if masked:
                    col_idx = k * col_tile + m * _LANE + lane
                    chunk = jnp.where(col_idx < cols, chunk, 0.0)
                acc = acc + chunk
            acc_ref[pl.ds(r0, slab), :] = acc
            return carry

        if n_slabs == 1:
            slab_body(0, 0)
        else:
            jax.lax.fori_loop(
                0, n_slabs,
                lambda s, c: slab_body(pl.multiple_of(s * slab, slab), c), 0)

    if needs_mask:
        # Mask only the final reduction step; steady-state steps stay unmasked.
        @pl.when(k < nk - 1)
        def _():
            _accumulate(masked=False)

        @pl.when(k == nk - 1)
        def _():
            _accumulate(masked=True)
    else:
        _accumulate(masked=False)

    @pl.when(k == nk - 1)
    def _():
        row_sum = jnp.sum(acc_ref[...], axis=-1, keepdims=True)   # one XLU reduce
        o_ref[...] = (row_sum * inv_cols).astype(o_ref.dtype)


def _gap_rows_generic(x2, cfg):
    rows, cols = x2.shape
    itemsize = jnp.dtype(x2.dtype).itemsize

    # Column (reduction) tiling: multiple of 128, rebalanced, VMEM-bounded.
    col_tile = min(_round_up(cols, _LANE), _MAX_COL_TILE)
    grid_cols = pl.cdiv(cols, col_tile)
    col_tile = min(_round_up(pl.cdiv(cols, grid_cols), _LANE), _MAX_COL_TILE)
    grid_cols = pl.cdiv(cols, col_tile)
    needs_mask = (cols % col_tile) != 0

    sublane = max(8, 32 // itemsize)     # 8 f32 / 16 bf16 / 32 int8
    row_tile, slab, n_slabs = _choose_row_tile(
        rows, 2 * col_tile * itemsize, sublane, cfg)   # 2 = double-buffered input
    grid_rows = pl.cdiv(rows, row_tile)

    kernel = functools.partial(
        _gap_kernel, cols=cols, col_tile=col_tile, inv_cols=1.0 / float(cols),
        needs_mask=needs_mask, n_chunks=col_tile // _LANE,
        slab=slab, n_slabs=n_slabs)

    # TODO(synk): sweep pl.Buffered(3) on v7x (expected 0-5%); default depth-2 kept.
    return pl.pallas_call(
        kernel,
        out_shape=jax.ShapeDtypeStruct((rows, 1), x2.dtype),
        grid_spec=pltpu.PrefetchScalarGridSpec(
            num_scalar_prefetch=0,
            grid=(grid_rows, grid_cols),
            in_specs=[pl.BlockSpec((row_tile, col_tile), lambda i, k: (i, k))],
            out_specs=pl.BlockSpec((row_tile, 1), lambda i, k: (i, 0)),
            scratch_shapes=[pltpu.VMEM((row_tile, _LANE), jnp.float32)],
        ),
        compiler_params=pltpu.CompilerParams(
            dimension_semantics=("parallel", "arbitrary"),
            vmem_limit_bytes=cfg.vmem_limit,
        ),
    )(x2)


# ----------------------------------------------------------------------------------
# Packed path: small spatial maps (cols < 512).  Pack g rows into the lane dimension
# (free row-major reshape) and reduce the g segments with one MXU matmul against a
# resident (g*cols, g) block-ones matrix.  Restores contiguous DMA + full lanes.
# ----------------------------------------------------------------------------------
def _packed_gap_kernel(x_ref, ones_ref, o_ref, *, inv_cols, slab, n_slabs):
    ones = ones_ref[...]

    def slab_body(r0, carry):
        x = x_ref[pl.ds(r0, slab), :].astype(jnp.float32)
        seg_sum = jnp.dot(x, ones, preferred_element_type=jnp.float32)
        o_ref[pl.ds(r0, slab), :] = (seg_sum * inv_cols).astype(o_ref.dtype)
        return carry

    if n_slabs == 1:
        slab_body(0, 0)
    else:
        jax.lax.fori_loop(
            0, n_slabs, lambda s, c: slab_body(pl.multiple_of(s * slab, slab), c), 0)


def _pick_pack_factor(rows, cols):
    limit = min(_PACK_MAX_LANES // cols, _PACK_MAX_FACTOR, rows)
    best = 1
    for g in range(2, limit + 1):
        if rows % g == 0:
            best = g
    return best


def _gap_rows_packed(x2, g, cfg):
    rows, cols = x2.shape
    itemsize = jnp.dtype(x2.dtype).itemsize
    rows_p = rows // g
    packed_cols = g * cols
    xp = x2.reshape(rows_p, packed_cols)       # free: (rows, cols) is row-major

    # (packed_cols, g) block-diagonal ones: column j sums the lanes of segment j.
    seg = jnp.arange(packed_cols, dtype=jnp.int32) // cols
    ones_mat = (seg[:, None] == jnp.arange(g, dtype=jnp.int32)[None, :]
                ).astype(jnp.float32)

    sublane = max(8, 32 // itemsize)
    row_tile, slab, n_slabs = _choose_row_tile(
        rows_p, 2 * packed_cols * itemsize, sublane, cfg)
    grid_rows = pl.cdiv(rows_p, row_tile)

    kernel = functools.partial(_packed_gap_kernel, inv_cols=1.0 / float(cols),
                               slab=slab, n_slabs=n_slabs)

    out = pl.pallas_call(
        kernel,
        out_shape=jax.ShapeDtypeStruct((rows_p, g), x2.dtype),
        grid_spec=pltpu.PrefetchScalarGridSpec(
            num_scalar_prefetch=0,
            grid=(grid_rows,),
            in_specs=[
                pl.BlockSpec((row_tile, packed_cols), lambda i: (i, 0)),
                pl.BlockSpec((packed_cols, g), lambda i: (0, 0)),   # stays resident
            ],
            out_specs=pl.BlockSpec((row_tile, g), lambda i: (i, 0)),
        ),
        compiler_params=pltpu.CompilerParams(
            dimension_semantics=("parallel",),
            vmem_limit_bytes=cfg.vmem_limit,
        ),
    )(xp, ones_mat)
    return out.reshape(rows, 1)


# ----------------------------------------------------------------------------------
# Public wrappers
# ----------------------------------------------------------------------------------
def global_avg_pool(x, *, force_pallas=False):
    """Global average pooling: (N, C, *spatial) -> (N, C, *(1,)*len(spatial))."""
    if x.ndim < 3:
        raise ValueError("expected (N, C, *spatial) input")
    N, C = int(x.shape[0]), int(x.shape[1])
    spatial = x.shape[2:]
    rows = N * C
    cols = 1
    for s in spatial:
        cols *= int(s)
    out_shape = (N, C) + (1,) * len(spatial)

    if cols == 1:                              # mean over one element: identity
        return x.reshape(out_shape)

    cfg = _config()
    itemsize = jnp.dtype(x.dtype).itemsize
    if (not force_pallas) and rows * cols * itemsize < cfg.small_bytes:
        # Below ~1-2 MiB, kernel launch + pipeline prologue dominate: fused XLA wins.
        mean = jnp.mean(x.astype(jnp.float32).reshape(rows, cols), axis=-1)
        return mean.astype(x.dtype).reshape(out_shape)

    x2 = x.reshape(rows, cols)
    if cols < _PACK_COLS_MAX:
        g = _pick_pack_factor(rows, cols)
        if g >= 2:
            return _gap_rows_packed(x2, g, cfg).reshape(out_shape)
    return _gap_rows_generic(x2, cfg).reshape(out_shape)


# Backwards-compatible name for the NCHW (dim=2) case.
def adaptive_avg_pool2d_1x1(x, *, force_pallas=False):
    return global_avg_pool(x, force_pallas=force_pallas)


def adaptive_average_pooling_neck(inputs):
    """Mirrors AdaptiveAveragePooling.forward: tuple of arrays or a single array."""
    if isinstance(inputs, tuple):
        return tuple(global_avg_pool(x) for x in inputs)
    elif isinstance(inputs, jnp.ndarray) or hasattr(inputs, "shape"):
        return global_avg_pool(inputs)
    else:
        raise TypeError("neck inputs should be tuple or jax array")


if __name__ == "__main__":
    key = jax.random.PRNGKey(0)
    keys = jax.random.split(key, 8)

    def check(x, out, atol=1e-5, rtol=1e-5):
        spatial_axes = tuple(range(2, x.ndim))
        ref = jnp.mean(x.astype(jnp.float32), axis=spatial_axes, keepdims=True)
        assert out.shape == x.shape[:2] + (1,) * (x.ndim - 2), (out.shape, x.shape)
        assert out.dtype == x.dtype
        assert jnp.allclose(out.astype(jnp.float32), ref, atol=atol, rtol=rtol), \
            float(jnp.max(jnp.abs(out.astype(jnp.float32) - ref)))

    # 1) small NCHW, cols=256 -> packed (lane-dense, MXU) path.
    x1 = jax.random.normal(keys[0], (2, 4, 16, 16), dtype=jnp.float32)
    check(x1, jax.block_until_ready(global_avg_pool(x1, force_pallas=True)))

    # 2) ResNet-style 7x7 spatial -> packed path, non-128-aligned segments (g=32).
    x2 = jax.random.normal(keys[1], (2, 64, 7, 7), dtype=jnp.float32)
    check(x2, jax.block_until_ready(global_avg_pool(x2, force_pallas=True)))

    # 3) 56x56 -> generic path, single col block, masked tail (3136 % 128 != 0).
    x3 = jax.random.normal(keys[2], (2, 32, 56, 56), dtype=jnp.float32)
    check(x3, jax.block_until_ready(global_avg_pool(x3, force_pallas=True)))

    # 4) 91x91 -> generic path, 2 col blocks, mask applied only on the last step.
    x4 = jax.random.normal(keys[3], (2, 4, 91, 91), dtype=jnp.float32)
    check(x4, jax.block_until_ready(global_avg_pool(x4, force_pallas=True)))

    # 5) 128x128 -> generic path, 2 col blocks, no masking at all.
    x5 = jax.random.normal(keys[4], (2, 4, 128, 128), dtype=jnp.float32)
    check(x5, jax.block_until_ready(global_avg_pool(x5, force_pallas=True)))

    # 6) bf16 input: f32 accumulation, bf16 output.
    x6 = jax.random.normal(keys[5], (2, 8, 56, 56),
                           dtype=jnp.float32).astype(jnp.bfloat16)
    check(x6, jax.block_until_ready(global_avg_pool(x6, force_pallas=True)),
          atol=2e-2, rtol=2e-2)

    # 7) tuple input through the neck wrapper (small tensors take the XLA fallback).
    x7 = jax.random.normal(keys[6], (2, 8, 8, 8), dtype=jnp.float32)
    outs = jax.block_until_ready(adaptive_average_pooling_neck((x1, x7)))
    check(x1, outs[0])
    check(x7, outs[1])

    # 8) dim=3 input: (N, C, D, H, W) -> (N, C, 1, 1, 1).
    x8 = jax.random.normal(keys[7], (2, 4, 4, 8, 8), dtype=jnp.float32)
    check(x8, jax.block_until_ready(global_avg_pool(x8, force_pallas=True)))

    print("KERNEL_OK")
</pallas_src>

<mosaic_0001>
module attributes {stable_mosaic.version = 11 : i64} {
  func.func @_packed_gap_kernel(%arg0: i32, %arg1: memref<1x2048xf32, #tpu.memory_space<vmem>>, %arg2: memref<2048x8xf32, #tpu.memory_space<vmem>>, %arg3: memref<1x8xf32, #tpu.memory_space<vmem>>) attributes {dimension_semantics = [#tpu.dimension_semantics<parallel>], iteration_bounds = array<i64: 1>, scalar_prefetch = 0 : i64, scratch_operands = 0 : i64, tpu.core_type = #tpu.core_type<tc>, window_params = [{transform_indices = @transform_0, window_bounds = array<i64: 1, 2048>}, {pipeline_mode = #tpu.pipeline_mode<synchronous>, transform_indices = @transform_1, window_bounds = array<i64: 2048, 8>}, {transform_indices = @transform_2, window_bounds = array<i64: 1, 8>}]} {
    %c0 = arith.constant 0 : index
    %c0_0 = arith.constant 0 : index
    %0 = vector.load %arg2[%c0, %c0_0] : memref<2048x8xf32, #tpu.memory_space<vmem>>, vector<2048x8xf32>
    %c0_1 = arith.constant 0 : index
    %c0_2 = arith.constant 0 : index
    %1 = vector.load %arg1[%c0_1, %c0_2] : memref<1x2048xf32, #tpu.memory_space<vmem>>, vector<1x2048xf32>
    %cst = arith.constant dense<0.000000e+00> : vector<1x8xf32>
    %2 = tpu.matmul %1, %0, %cst {dimension_numbers = #tpu.dot_dimension_numbers<[1], [0], [0], [1], [0, 0, 1, 1], [], []>} : vector<1x2048xf32>, vector<2048x8xf32>, vector<1x8xf32> -> vector<1x8xf32>
    %cst_3 = arith.constant 3.906250e-03 : f32
    %3 = vector.broadcast %cst_3 : f32 to vector<1x8xf32>
    %4 = arith.mulf %2, %3 : vector<1x8xf32>
    %c0_4 = arith.constant 0 : index
    %c0_5 = arith.constant 0 : index
    %5 = vector.load %arg3[%c0_4, %c0_5] : memref<1x8xf32, #tpu.memory_space<vmem>>, vector<1x8xf32>
    tpu.vector_store %arg3[%c0_4, %c0_5], %4 {strides = array<i32>} : memref<1x8xf32, #tpu.memory_space<vmem>>, vector<1x8xf32>,
    return
  }
  func.func @transform_0(%arg0: i32) -> (i32, i32) {
    %c0_i32 = arith.constant 0 : i32
    %c0_i32_0 = arith.constant 0 : i32
    return %arg0, %c0_i32 : i32, i32
  }
  func.func @transform_1(%arg0: i32) -> (i32, i32) {
    %c0_i32 = arith.constant 0 : i32
    %c0_i32_0 = arith.constant 0 : i32
    %c0_i32_1 = arith.constant 0 : i32
    return %c0_i32, %c0_i32_0 : i32, i32
  }
  func.func @transform_2(%arg0: i32) -> (i32, i32) {
    %c0_i32 = arith.constant 0 : i32
    %c0_i32_0 = arith.constant 0 : i32
    return %arg0, %c0_i32 : i32, i32
  }
}

</mosaic_0001>

<llo_original>
// kernel: tpu_custom_call.1
$region0: #{tpu_custom_call.1}
  #allocation0 [shape = 'u32[]', space=smem, size = 0x4, offset = 0x4, fixed_abs, tag = 'smem constant byte address 0x4 - core index']
  #allocation1 [shape = 'u32[144,128]{1,0:T(1,128)}', space=vmem, size = 0x12000, scoped, tag = 'internal scratch']
  %s0 = inlined_call_operand.hbm [shape: f32[1,2048], index: 0, kind: input, shape index: {}]
  %s1 = inlined_call_operand.hbm [shape: f32[2048,8], index: 1, kind: input, shape index: {}]
  %s2 = inlined_call_operand.hbm [shape: f32[1,8], index: 2, kind: output, shape index: {}]
  %s3 = sld [smem:[#allocation0]]
  $region26: #{tpu_custom_call.1} parent=0
    _
  %s5 = ssub.s32 1, %s3
  %s6 = scalar_select 0, %s5, %s3
  $region1: #{tpu_custom_call.1} parent=0
    #allocation2 [shape = 'u8[8192]{0}', space=vmem, size = 0x2000, scoped, tag = 'input window, operand 0, single buffered']
    #allocation3 [shape = 's32[1]{0}', space=sflag, size = 0x4, scoped, tag = 'scoped memory for tpu_custom_call.1']
    #allocation4 [shape = 's32[1]{0}', space=sflag, size = 0x4, scoped, tag = 'scoped memory for tpu_custom_call.1']
    #allocation5 [shape = 'u8[1048576]{0}', space=vmem, size = 0x100000, scoped, tag = 'input window, operand 1, single buffered']
    #allocation6 [shape = 's32[1]{0}', space=sflag, size = 0x4, scoped, tag = 'scoped memory for tpu_custom_call.1']
    #allocation7 [shape = 'u8[512]{0}', space=vmem, size = 0x400, scoped, tag = 'output window, operand 0, single buffered']
    %7 = vsyncpa [#allocation3], 0
    %8 = vsyncpa [#allocation6], 0
    %9 = vsyncpa [#allocation4], 0
    // Predicated region
    $region2: #{tpu_custom_call.1} parent=1 // pred_check
      _
    $region3: #{tpu_custom_call.1} parent=1 // pred_check_branch
      %11 = sbr.rel (0) target = $region5
    $region4: #{tpu_custom_call.1} parent=1 // pred_region
      %s13 = ssub.s32 256, 256
      %14 = vsyncadd [#allocation3], %s13
      %s16 = sshll.u32 [#allocation2], 4
      %s17 = int_to_ptr.vmem [resolvable:$true] %s16
      %19 = dma.hbm_to_vmem [thread:$0]  %s0, 256, %s17, [#allocation3]
    $region5: #{tpu_custom_call.1} parent=1 // pred_fallthru
      _
    // Predicated region
    $region6: #{tpu_custom_call.1} parent=1 // pred_check
      _
    $region7: #{tpu_custom_call.1} parent=1 // pred_check_branch
      %21 = sbr.rel (0) target = $region9
    $region8: #{tpu_custom_call.1} parent=1 // pred_region
      %s23 = ssub.s32 32768, 32768
      %24 = vsyncadd [#allocation6], %s23
      %s25 = sshll.u32 [#allocation5], 4
      %s26 = int_to_ptr.vmem [resolvable:$true] %s25
      %31 = dma.hbm_to_vmem [thread:$0]  %s1, 32768, %s26, [#allocation6], 128, 128, 8
    $region9: #{tpu_custom_call.1} parent=1 // pred_fallthru
      _
    // Predicated region
    $region10: #{tpu_custom_call.1} parent=1 // pred_check
      _
    $region11: #{tpu_custom_call.1} parent=1 // pred_check_branch
      %33 = sbr.rel (0) target = $region13
    $region12: #{tpu_custom_call.1} parent=1 // pred_region
      %34 = dma.done [#allocation3], 256
    $region13: #{tpu_custom_call.1} parent=1 // pred_fallthru
      _
    // Predicated region
    $region14: #{tpu_custom_call.1} parent=1 // pred_check
      _
    $region15: #{tpu_custom_call.1} parent=1 // pred_check_branch
      %36 = sbr.rel (0) target = $region17
    $region16: #{tpu_custom_call.1} parent=1 // pred_region
      %37 = dma.done [#allocation6], 32768
    $region17: #{tpu_custom_call.1} parent=1 // pred_fallthru
      _
    %v38 = vld [vmem:[#allocation5] sm:$0xff]
    %v39 = vld [vmem:[#allocation5 + $0x8] sm:$0xff]
    %v40 = vld [vmem:[#allocation5 + $0x10] sm:$0xff]
    %v41 = vld [vmem:[#allocation5 + $0x18] sm:$0xff]
    %v42 = vld [vmem:[#allocation5 + $0x20] sm:$0xff]
    %v43 = vld [vmem:[#allocation5 + $0x28] sm:$0xff]
    %v44 = vld [vmem:[#allocation5 + $0x30] sm:$0xff]
    %v45 = vld [vmem:[#allocation5 + $0x38] sm:$0xff]
    %v46 = vld [vmem:[#allocation5 + $0x40] sm:$0xff]
    %v47 = vld [vmem:[#allocation5 + $0x48] sm:$0xff]
    %v48 = vld [vmem:[#allocation5 + $0x50] sm:$0xff]
    %v49 = vld [vmem:[#allocation5 + $0x58] sm:$0xff]
    %v50 = vld [vmem:[#allocation5 + $0x60] sm:$0xff]
    %v51 = vld [vmem:[#allocation5 + $0x68] sm:$0xff]
    %v52 = vld [vmem:[#allocation5 + $0x70] sm:$0xff]
    %v53 = vld [vmem:[#allocation5 + $0x78] sm:$0xff]
    %v54 = vld [vmem:[#allocation5 + $0x80] sm:$0xff]
    %v55 = vld [vmem:[#allocation5 + $0x88] sm:$0xff]
    %v56 = vld [vmem:[#allocation5 + $0x90] sm:$0xff]
    %v57 = vld [vmem:[#allocation5 + $0x98] sm:$0xff]
    %v58 = vld [vmem:[#allocation5 + $0xa0] sm:$0xff]
    %v59 = vld [vmem:[#allocation5 + $0xa8] sm:$0xff]
    %v60 = vld [vmem:[#allocation5 + $0xb0] sm:$0xff]
    %v61 = vld [vmem:[#allocation5 + $0xb8] sm:$0xff]
    %v62 = vld [vmem:[#allocation5 + $0xc0] sm:$0xff]
    %v63 = vld [vmem:[#allocation5 + $0xc8] sm:$0xff]
    %v64 = vld [vmem:[#allocation5 + $0xd0] sm:$0xff]
    %v65 = vld [vmem:[#allocation5 + $0xd8] sm:$0xff]
    %v66 = vld [vmem:[#allocation5 + $0xe0] sm:$0xff]
    %v67 = vld [vmem:[#allocation5 + $0xe8] sm:$0xff]
    %v68 = vld [vmem:[#allocation5 + $0xf0] sm:$0xff]
    %v69 = vld [vmem:[#allocation5 + $0xf8] sm:$0xff]
    %v70 = vld [vmem:[#allocation5 + $0x100] sm:$0xff]
    %v71 = vld [vmem:[#allocation5 + $0x108] sm:$0xff]
    %v72 = vld [vmem:[#allocation5 + $0x110] sm:$0xff]
    %v73 = vld [vmem:[#allocation5 + $0x118] sm:$0xff]
    %v74 = vld [vmem:[#allocation5 + $0x120] sm:$0xff]
    %v75 = vld [vmem:[#allocation5 + $0x128] sm:$0xff]
    %v76 = vld [vmem:[#allocation5 + $0x130] sm:$0xff]
    %v77 = vld [vmem:[#allocation5 + $0x138] sm:$0xff]
    %v78 = vld [vmem:[#allocation5 + $0x140] sm:$0xff]
    %v79 = vld [vmem:[#allocation5 + $0x148] sm:$0xff]
    %v80 = vld [vmem:[#allocation5 + $0x150] sm:$0xff]
    %v81 = vld [vmem:[#allocation5 + $0x158] sm:$0xff]
    %v82 = vld [vmem:[#allocation5 + $0x160] sm:$0xff]
    %v83 = vld [vmem:[#allocation5 + $0x168] sm:$0xff]
    %v84 = vld [vmem:[#allocation5 + $0x170] sm:$0xff]
    %v85 = vld [vmem:[#allocation5 + $0x178] sm:$0xff]
    %v86 = vld [vmem:[#allocation5 + $0x180] sm:$0xff]
    %v87 = vld [vmem:[#allocation5 + $0x188] sm:$0xff]
    %v88 = vld [vmem:[#allocation5 + $0x190] sm:$0xff]
    %v89 = vld [vmem:[#allocation5 + $0x198] sm:$0xff]
    %v90 = vld [vmem:[#allocation5 + $0x1a0] sm:$0xff]
    %v91 = vld [vmem:[#allocation5 + $0x1a8] sm:$0xff]
    %v92 = vld [vmem:[#allocation5 + $0x1b0] sm:$0xff]
    %v93 = vld [vmem:[#allocation5 + $0x1b8] sm:$0xff]
    %v94 = vld [vmem:[#allocation5 + $0x1c0] sm:$0xff]
    %v95 = vld [vmem:[#allocation5 + $0x1c8] sm:$0xff]
    %v96 = vld [vmem:[#allocation5 + $0x1d0] sm:$0xff]
    %v97 = vld [vmem:[#allocation5 + $0x1d8] sm:$0xff]
    %v98 = vld [vmem:[#allocation5 + $0x1e0] sm:$0xff]
    %v99 = vld [vmem:[#allocation5 + $0x1e8] sm:$0xff]
    %v100 = vld [vmem:[#allocation5 + $0x1f0] sm:$0xff]
    %v101 = vld [vmem:[#allocation5 + $0x1f8] sm:$0xff]
    %v102 = vld [vmem:[#allocation5 + $0x200] sm:$0xff]
    %v103 = vld [vmem:[#allocation5 + $0x208] sm:$0xff]
    %v104 = vld [vmem:[#allocation5 + $0x210] sm:$0xff]
    %v105 = vld [vmem:[#allocation5 + $0x218] sm:$0xff]
    %v106 = vld [vmem:[#allocation5 + $0x220] sm:$0xff]
    %v107 = vld [vmem:[#allocation5 + $0x228] sm:$0xff]
    %v108 = vld [vmem:[#allocation5 + $0x230] sm:$0xff]
    %v109 = vld [vmem:[#allocation5 + $0x238] sm:$0xff]
    %v110 = vld [vmem:[#allocation5 + $0x240] sm:$0xff]
    %v111 = vld [vmem:[#allocation5 + $0x248] sm:$0xff]
    %v112 = vld [vmem:[#allocation5 + $0x250] sm:$0xff]
    %v113 = vld [vmem:[#allocation5 + $0x258] sm:$0xff]
    %v114 = vld [vmem:[#allocation5 + $0x260] sm:$0xff]
    %v115 = vld [vmem:[#allocation5 + $0x268] sm:$0xff]
    %v116 = vld [vmem:[#allocation5 + $0x270] sm:$0xff]
    %v117 = vld [vmem:[#allocation5 + $0x278] sm:$0xff]
    %v118 = vld [vmem:[#allocation5 + $0x280] sm:$0xff]
    %v119 = vld [vmem:[#allocation5 + $0x288] sm:$0xff]
    %v120 = vld [vmem:[#allocation5 + $0x290] sm:$0xff]
    %v121 = vld [vmem:[#allocation5 + $0x298] sm:$0xff]
    %v122 = vld [vmem:[#allocation5 + $0x2a0] sm:$0xff]
    %v123 = vld [vmem:[#allocation5 + $0x2a8] sm:$0xff]
    %v124 = vld [vmem:[#allocation5 + $0x2b0] sm:$0xff]
    %v125 = vld [vmem:[#allocation5 + $0x2b8] sm:$0xff]
    %v126 = vld [vmem:[#allocation5 + $0x2c0] sm:$0xff]
    %v127 = vld [vmem:[#allocation5 + $0x2c8] sm:$0xff]
    %v128 = vld [vmem:[#allocation5 + $0x2d0] sm:$0xff]
    %v129 = vld [vmem:[#allocation5 + $0x2d8] sm:$0xff]
    %v130 = vld [vmem:[#allocation5 + $0x2e0] sm:$0xff]
    %v131 = vld [vmem:[#allocation5 + $0x2e8] sm:$0xff]
    %v132 = vld [vmem:[#allocation5 + $0x2f0] sm:$0xff]
    %v133 = vld [vmem:[#allocation5 + $0x2f8] sm:$0xff]
    %v134 = vld [vmem:[#allocation5 + $0x300] sm:$0xff]
    %v135 = vld [vmem:[#allocation5 + $0x308] sm:$0xff]
    %v136 = vld [vmem:[#allocation5 + $0x310] sm:$0xff]
    %v137 = vld [vmem:[#allocation5 + $0x318] sm:$0xff]
    %v138 = vld [vmem:[#allocation5 + $0x320] sm:$0xff]
    %v139 = vld [vmem:[#allocation5 + $0x328] sm:$0xff]
    %v140 = vld [vmem:[#allocation5 + $0x330] sm:$0xff]
    %v141 = vld [vmem:[#allocation5 + $0x338] sm:$0xff]
    %v142 = vld [vmem:[#allocation5 + $0x340] sm:$0xff]
    %v143 = vld [vmem:[#allocation5 + $0x348] sm:$0xff]
    %v144 = vld [vmem:[#allocation5 + $0x350] sm:$0xff]
    %v145 = vld [vmem:[#allocation5 + $0x358] sm:$0xff]
    %v146 = vld [vmem:[#allocation5 + $0x360] sm:$0xff]
    %v147 = vld [vmem:[#allocation5 + $0x368] sm:$0xff]
    %v148 = vld [vmem:[#allocation5 + $0x370] sm:$0xff]
    %v149 = vld [vmem:[#allocation5 + $0x378] sm:$0xff]
    %v150 = vld [vmem:[#allocation5 + $0x380] sm:$0xff]
    %v151 = vld [vmem:[#allocation5 + $0x388] sm:$0xff]
    %v152 = vld [vmem:[#allocation5 + $0x390] sm:$0xff]
    %v153 = vld [vmem:[#allocation5 + $0x398] sm:$0xff]
    %v154 = vld [vmem:[#allocation5 + $0x3a0] sm:$0xff]
    %v155 = vld [vmem:[#allocation5 + $0x3a8] sm:$0xff]
    %v156 = vld [vmem:[#allocation5 + $0x3b0] sm:$0xff]
    %v157 = vld [vmem:[#allocation5 + $0x3b8] sm:$0xff]
    %v158 = vld [vmem:[#allocation5 + $0x3c0] sm:$0xff]
    %v159 = vld [vmem:[#allocation5 + $0x3c8] sm:$0xff]
    %v160 = vld [vmem:[#allocation5 + $0x3d0] sm:$0xff]
    %v161 = vld [vmem:[#allocation5 + $0x3d8] sm:$0xff]
    %v162 = vld [vmem:[#allocation5 + $0x3e0] sm:$0xff]
    %v163 = vld [vmem:[#allocation5 + $0x3e8] sm:$0xff]
    %v164 = vld [vmem:[#allocation5 + $0x3f0] sm:$0xff]
    %v165 = vld [vmem:[#allocation5 + $0x3f8] sm:$0xff]
    %v166 = vld [vmem:[#allocation5 + $0x400] sm:$0xff]
    %v167 = vld [vmem:[#allocation5 + $0x408] sm:$0xff]
    %v168 = vld [vmem:[#allocation5 + $0x410] sm:$0xff]
    %v169 = vld [vmem:[#allocation5 + $0x418] sm:$0xff]
    %v170 = vld [vmem:[#allocation5 + $0x420] sm:$0xff]
    %v171 = vld [vmem:[#allocation5 + $0x428] sm:$0xff]
    %v172 = vld [vmem:[#allocation5 + $0x430] sm:$0xff]
    %v173 = vld [vmem:[#allocation5 + $0x438] sm:$0xff]
    %v174 = vld [vmem:[#allocation5 + $0x440] sm:$0xff]
    %v175 = vld [vmem:[#allocation5 + $0x448] sm:$0xff]
    %v176 = vld [vmem:[#allocation5 + $0x450] sm:$0xff]
    %v177 = vld [vmem:[#allocation5 + $0x458] sm:$0xff]
    %v178 = vld [vmem:[#allocation5 + $0x460] sm:$0xff]
    %v179 = vld [vmem:[#allocation5 + $0x468] sm:$0xff]
    %v180 = vld [vmem:[#allocation5 + $0x470] sm:$0xff]
    %v181 = vld [vmem:[#allocation5 + $0x478] sm:$0xff]
    %v182 = vld [vmem:[#allocation5 + $0x480] sm:$0xff]
    %v183 = vld [vmem:[#allocation5 + $0x488] sm:$0xff]
    %v184 = vld [vmem:[#allocation5 + $0x490] sm:$0xff]
    %v185 = vld [vmem:[#allocation5 + $0x498] sm:$0xff]
    %v186 = vld [vmem:[#allocation5 + $0x4a0] sm:$0xff]
    %v187 = vld [vmem:[#allocation5 + $0x4a8] sm:$0xff]
    %v188 = vld [vmem:[#allocation5 + $0x4b0] sm:$0xff]
    %v189 = vld [vmem:[#allocation5 + $0x4b8] sm:$0xff]
    %v190 = vld [vmem:[#allocation5 + $0x4c0] sm:$0xff]
    %v191 = vld [vmem:[#allocation5 + $0x4c8] sm:$0xff]
    %v192 = vld [vmem:[#allocation5 + $0x4d0] sm:$0xff]
    %v193 = vld [vmem:[#allocation5 + $0x4d8] sm:$0xff]
    %v194 = vld [vmem:[#allocation5 + $0x4e0] sm:$0xff]
    %v195 = vld [vmem:[#allocation5 + $0x4e8] sm:$0xff]
    %v196 = vld [vmem:[#allocation5 + $0x4f0] sm:$0xff]
    %v197 = vld [vmem:[#allocation5 + $0x4f8] sm:$0xff]
    %v198 = vld [vmem:[#allocation5 + $0x500] sm:$0xff]
    %v199 = vld [vmem:[#allocation5 + $0x508] sm:$0xff]
    %v200 = vld [vmem:[#allocation5 + $0x510] sm:$0xff]
    %v201 = vld [vmem:[#allocation5 + $0x518] sm:$0xff]
    %v202 = vld [vmem:[#allocation5 + $0x520] sm:$0xff]
    %v203 = vld [vmem:[#allocation5 + $0x528] sm:$0xff]
    %v204 = vld [vmem:[#allocation5 + $0x530] sm:$0xff]
    %v205 = vld [vmem:[#allocation5 + $0x538] sm:$0xff]
    %v206 = vld [vmem:[#allocation5 + $0x540] sm:$0xff]
    %v207 = vld [vmem:[#allocation5 + $0x548] sm:$0xff]
    %v208 = vld [vmem:[#allocation5 + $0x550] sm:$0xff]
    %v209 = vld [vmem:[#allocation5 + $0x558] sm:$0xff]
    %v210 = vld [vmem:[#allocation5 + $0x560] sm:$0xff]
    %v211 = vld [vmem:[#allocation5 + $0x568] sm:$0xff]
    %v212 = vld [vmem:[#allocation5 + $0x570] sm:$0xff]
    %v213 = vld [vmem:[#allocation5 + $0x578] sm:$0xff]
    %v214 = vld [vmem:[#allocation5 + $0x580] sm:$0xff]
    %v215 = vld [vmem:[#allocation5 + $0x588] sm:$0xff]
    %v216 = vld [vmem:[#allocation5 + $0x590] sm:$0xff]
    %v217 = vld [vmem:[#allocation5 + $0x598] sm:$0xff]
    %v218 = vld [vmem:[#allocation5 + $0x5a0] sm:$0xff]
    %v219 = vld [vmem:[#allocation5 + $0x5a8] sm:$0xff]
    %v220 = vld [vmem:[#allocation5 + $0x5b0] sm:$0xff]
    %v221 = vld [vmem:[#allocation5 + $0x5b8] sm:$0xff]
    %v222 = vld [vmem:[#allocation5 + $0x5c0] sm:$0xff]
    %v223 = vld [vmem:[#allocation5 + $0x5c8] sm:$0xff]
    %v224 = vld [vmem:[#allocation5 + $0x5d0] sm:$0xff]
    %v225 = vld [vmem:[#allocation5 + $0x5d8] sm:$0xff]
    %v226 = vld [vmem:[#allocation5 + $0x5e0] sm:$0xff]
    %v227 = vld [vmem:[#allocation5 + $0x5e8] sm:$0xff]
    %v228 = vld [vmem:[#allocation5 + $0x5f0] sm:$0xff]
    %v229 = vld [vmem:[#allocation5 + $0x5f8] sm:$0xff]
    %v230 = vld [vmem:[#allocation5 + $0x600] sm:$0xff]
    %v231 = vld [vmem:[#allocation5 + $0x608] sm:$0xff]
    %v232 = vld [vmem:[#allocation5 + $0x610] sm:$0xff]
    %v233 = vld [vmem:[#allocation5 + $0x618] sm:$0xff]
    %v234 = vld [vmem:[#allocation5 + $0x620] sm:$0xff]
    %v235 = vld [vmem:[#allocation5 + $0x628] sm:$0xff]
    %v236 = vld [vmem:[#allocation5 + $0x630] sm:$0xff]
    %v237 = vld [vmem:[#allocation5 + $0x638] sm:$0xff]
    %v238 = vld [vmem:[#allocation5 + $0x640] sm:$0xff]
    %v239 = vld [vmem:[#allocation5 + $0x648] sm:$0xff]
    %v240 = vld [vmem:[#allocation5 + $0x650] sm:$0xff]
    %v241 = vld [vmem:[#allocation5 + $0x658] sm:$0xff]
    %v242 = vld [vmem:[#allocation5 + $0x660] sm:$0xff]
    %v243 = vld [vmem:[#allocation5 + $0x668] sm:$0xff]
    %v244 = vld [vmem:[#allocation5 + $0x670] sm:$0xff]
    %v245 = vld [vmem:[#allocation5 + $0x678] sm:$0xff]
    %v246 = vld [vmem:[#allocation5 + $0x680] sm:$0xff]
    %v247 = vld [vmem:[#allocation5 + $0x688] sm:$0xff]
    %v248 = vld [vmem:[#allocation5 + $0x690] sm:$0xff]
    %v249 = vld [vmem:[#allocation5 + $0x698] sm:$0xff]
    %v250 = vld [vmem:[#allocation5 + $0x6a0] sm:$0xff]
    %v251 = vld [vmem:[#allocation5 + $0x6a8] sm:$0xff]
    %v252 = vld [vmem:[#allocation5 + $0x6b0] sm:$0xff]
    %v253 = vld [vmem:[#allocation5 + $0x6b8] sm:$0xff]
    %v254 = vld [vmem:[#allocation5 + $0x6c0] sm:$0xff]
    %v255 = vld [vmem:[#allocation5 + $0x6c8] sm:$0xff]
    %v256 = vld [vmem:[#allocation5 + $0x6d0] sm:$0xff]
    %v257 = vld [vmem:[#allocation5 + $0x6d8] sm:$0xff]
    %v258 = vld [vmem:[#allocation5 + $0x6e0] sm:$0xff]
    %v259 = vld [vmem:[#allocation5 + $0x6e8] sm:$0xff]
    %v260 = vld [vmem:[#allocation5 + $0x6f0] sm:$0xff]
    %v261 = vld [vmem:[#allocation5 + $0x6f8] sm:$0xff]
    %v262 = vld [vmem:[#allocation5 + $0x700] sm:$0xff]
    %v263 = vld [vmem:[#allocation5 + $0x708] sm:$0xff]
    %v264 = vld [vmem:[#allocation5 + $0x710] sm:$0xff]
    %v265 = vld [vmem:[#allocation5 + $0x718] sm:$0xff]
    %v266 = vld [vmem:[#allocation5 + $0x720] sm:$0xff]
    %v267 = vld [vmem:[#allocation5 + $0x728] sm:$0xff]
    %v268 = vld [vmem:[#allocation5 + $0x730] sm:$0xff]
    %v269 = vld [vmem:[#allocation5 + $0x738] sm:$0xff]
    %v270 = vld [vmem:[#allocation5 + $0x740] sm:$0xff]
    %v271 = vld [vmem:[#allocation5 + $0x748] sm:$0xff]
    %v272 = vld [vmem:[#allocation5 + $0x750] sm:$0xff]
    %v273 = vld [vmem:[#allocation5 + $0x758] sm:$0xff]
    %v274 = vld [vmem:[#allocation5 + $0x760] sm:$0xff]
    %v275 = vld [vmem:[#allocation5 + $0x768] sm:$0xff]
    %v276 = vld [vmem:[#allocation5 + $0x770] sm:$0xff]
    %v277 = vld [vmem:[#allocation5 + $0x778] sm:$0xff]
    %v278 = vld [vmem:[#allocation5 + $0x780] sm:$0xff]
    %v279 = vld [vmem:[#allocation5 + $0x788] sm:$0xff]
    %v280 = vld [vmem:[#allocation5 + $0x790] sm:$0xff]
    %v281 = vld [vmem:[#allocation5 + $0x798] sm:$0xff]
    %v282 = vld [vmem:[#allocation5 + $0x7a0] sm:$0xff]
    %v283 = vld [vmem:[#allocation5 + $0x7a8] sm:$0xff]
    %v284 = vld [vmem:[#allocation5 + $0x7b0] sm:$0xff]
    %v285 = vld [vmem:[#allocation5 + $0x7b8] sm:$0xff]
    %v286 = vld [vmem:[#allocation5 + $0x7c0] sm:$0xff]
    %v287 = vld [vmem:[#allocation5 + $0x7c8] sm:$0xff]
    %v288 = vld [vmem:[#allocation5 + $0x7d0] sm:$0xff]
    %v289 = vld [vmem:[#allocation5 + $0x7d8] sm:$0xff]
    %v290 = vld [vmem:[#allocation5 + $0x7e0] sm:$0xff]
    %v291 = vld [vmem:[#allocation5 + $0x7e8] sm:$0xff]
    %v292 = vld [vmem:[#allocation5 + $0x7f0] sm:$0xff]
    %v293 = vld [vmem:[#allocation5 + $0x7f8] sm:$0xff]
    %v294 = vld [vmem:[#allocation2] sm:$0xff]
    %v295 = vld [vmem:[#allocation2 + $0x8] sm:$0xff]
    %v298 = vlaneseq
    %v299 = vshrl.u32 %v298, 7
    %v300 = vsub.s32 0, %v299
    %v301 = vrot.slane %v294, %v300
    %v302 = vlaneseq
    %v303 = vshrl.u32 %v302, 7
    %v304 = vsub.s32 1, %v303
    %v305 = vrot.slane %v294, %v304
    %v306 = vlaneseq
    %v307 = vshrl.u32 %v306, 7
    %v308 = vsub.s32 2, %v307
    %v309 = vrot.slane %v294, %v308
    %v310 = vlaneseq
    %v311 = vshrl.u32 %v310, 7
    %v312 = vsub.s32 3, %v311
    %v313 = vrot.slane %v294, %v312
    %v314 = vlaneseq
    %v315 = vshrl.u32 %v314, 7
    %v316 = vsub.s32 4, %v315
    %v317 = vrot.slane %v294, %v316
    %v318 = vlaneseq
    %v319 = vshrl.u32 %v318, 7
    %v320 = vsub.s32 5, %v319
    %v321 = vrot.slane %v294, %v320
    %v322 = vlaneseq
    %v323 = vshrl.u32 %v322, 7
    %v324 = vsub.s32 6, %v323
    %v325 = vrot.slane %v294, %v324
    %v326 = vlaneseq
    %v327 = vshrl.u32 %v326, 7
    %v328 = vsub.s32 7, %v327
    %v329 = vrot.slane %v294, %v328
    %v330 = vlaneseq
    %v331 = vshrl.u32 %v330, 7
    %v332 = vsub.s32 0, %v331
    %v333 = vrot.slane %v295, %v332
    %v334 = vlaneseq
    %v335 = vshrl.u32 %v334, 7
    %v336 = vsub.s32 1, %v335
    %v337 = vrot.slane %v295, %v336
    %v338 = vlaneseq
    %v339 = vshrl.u32 %v338, 7
    %v340 = vsub.s32 2, %v339
    %v341 = vrot.slane %v295, %v340
    %v342 = vlaneseq
    %v343 = vshrl.u32 %v342, 7
    %v344 = vsub.s32 3, %v343
    %v345 = vrot.slane %v295, %v344
    %v346 = vlaneseq
    %v347 = vshrl.u32 %v346, 7
    %v348 = vsub.s32 4, %v347
    %v349 = vrot.slane %v295, %v348
    %v350 = vlaneseq
    %v351 = vshrl.u32 %v350, 7
    %v352 = vsub.s32 5, %v351
    %v353 = vrot.slane %v295, %v352
    %v354 = vlaneseq
    %v355 = vshrl.u32 %v354, 7
    %v356 = vsub.s32 6, %v355
    %v357 = vrot.slane %v295, %v356
    %v358 = vlaneseq
    %v359 = vshrl.u32 %v358, 7
    %v360 = vsub.s32 7, %v359
    %v361 = vrot.slane %v295, %v360
    %378 = vmatprep.subr.mxu0 0.0
    %379 = vmatpush1.msra.mxu0 %v38
    %380 = vmatprep.subr.mxu0 0.0
    %381 = vmatpush1.msra.mxu0 %v39
    %382 = vmatprep.subr.mxu0 0.0
    %383 = vmatpush1.msra.mxu0 %v40
    %384 = vmatprep.subr.mxu0 0.0
    %385 = vmatpush1.msra.mxu0 %v41
    %386 = vmatprep.subr.mxu0 0.0
    %387 = vmatpush1.msra.mxu0 %v42
    %388 = vmatprep.subr.mxu0 0.0
    %389 = vmatpush1.msra.mxu0 %v43
    %390 = vmatprep.subr.mxu0 0.0
    %391 = vmatpush1.msra.mxu0 %v44
    %392 = vmatprep.subr.mxu0 0.0
    %393 = vmatpush1.msra.mxu0 %v45
    %394 = vmatprep.subr.mxu0 0.0
    %395 = vmatpush1.msra.mxu0 %v46
    %396 = vmatprep.subr.mxu0 0.0
    %397 = vmatpush1.msra.mxu0 %v47
    %398 = vmatprep.subr.mxu0 0.0
    %399 = vmatpush1.msra.mxu0 %v48
    %400 = vmatprep.subr.mxu0 0.0
    %401 = vmatpush1.msra.mxu0 %v49
    %402 = vmatprep.subr.mxu0 0.0
    %403 = vmatpush1.msra.mxu0 %v50
    %404 = vmatprep.subr.mxu0 0.0
    %405 = vmatpush1.msra.mxu0 %v51
    %406 = vmatprep.subr.mxu0 0.0
    %407 = vmatpush1.msra.mxu0 %v52
    %408 = vmatprep.subr.mxu0 0.0
    %409 = vmatpush1.msra.mxu0 %v53
    %410 = vmatprep.subr.mxu0 0.0
    %411 = vmatpush1.msra.mxu0 %v54
    %412 = vmatprep.subr.mxu0 0.0
    %413 = vmatpush1.msra.mxu0 %v55
    %414 = vmatprep.subr.mxu0 0.0
    %415 = vmatpush1.msra.mxu0 %v56
    %416 = vmatprep.subr.mxu0 0.0
    %417 = vmatpush1.msra.mxu0 %v57
    %418 = vmatprep.subr.mxu0 0.0
    %419 = vmatpush1.msra.mxu0 %v58
    %420 = vmatprep.subr.mxu0 0.0
    %421 = vmatpush1.msra.mxu0 %v59
    %422 = vmatprep.subr.mxu0 0.0
    %423 = vmatpush1.msra.mxu0 %v60
    %424 = vmatprep.subr.mxu0 0.0
    %425 = vmatpush1.msra.mxu0 %v61
    %426 = vmatprep.subr.mxu0 0.0
    %427 = vmatpush1.msra.mxu0 %v62
    %428 = vmatprep.subr.mxu0 0.0
    %429 = vmatpush1.msra.mxu0 %v63
    %430 = vmatprep.subr.mxu0 0.0
    %431 = vmatpush1.msra.mxu0 %v64
    %432 = vmatprep.subr.mxu0 0.0
    %433 = vmatpush1.msra.mxu0 %v65
    %434 = vmatprep.subr.mxu0 0.0
    %435 = vmatpush1.msra.mxu0 %v66
    %436 = vmatprep.subr.mxu0 0.0
    %437 = vmatpush1.msra.mxu0 %v67
    %438 = vmatprep.subr.mxu0 0.0
    %439 = vmatpush1.msra.mxu0 %v68
    %440 = vmatprep.subr.mxu0 0.0
    %441 = vmatpush1.msra.mxu0 %v69
    %442 = vmatprep.mubr.f32.mxu0 %v305
    %443 = vmatmul.mubr.f32.gmra.mrb[0].mxu0 %v301
    %v444 = vpop.f32.mrb[0].mxu0
    %v445 = vadd.f32 0.0, %v444
    %v446 = vpop.f32.mrb[0].mxu0
    %447 = vdwg.mxu0
    %448 = vmatprep.subr.mxu0 0.0
    %449 = vmatpush1.msra.mxu0 %v70
    %450 = vmatprep.subr.mxu0 0.0
    %451 = vmatpush1.msra.mxu0 %v71
    %452 = vmatprep.subr.mxu0 0.0
    %453 = vmatpush1.msra.mxu0 %v72
    %454 = vmatprep.subr.mxu0 0.0
    %455 = vmatpush1.msra.mxu0 %v73
    %456 = vmatprep.subr.mxu0 0.0
    %457 = vmatpush1.msra.mxu0 %v74
    %458 = vmatprep.subr.mxu0 0.0
    %459 = vmatpush1.msra.mxu0 %v75
    %460 = vmatprep.subr.mxu0 0.0
    %461 = vmatpush1.msra.mxu0 %v76
    %462 = vmatprep.subr.mxu0 0.0
    %463 = vmatpush1.msra.mxu0 %v77
    %464 = vmatprep.subr.mxu0 0.0
    %465 = vmatpush1.msra.mxu0 %v78
    %466 = vmatprep.subr.mxu0 0.0
    %467 = vmatpush1.msra.mxu0 %v79
    %468 = vmatprep.subr.mxu0 0.0
    %469 = vmatpush1.msra.mxu0 %v80
    %470 = vmatprep.subr.mxu0 0.0
    %471 = vmatpush1.msra.mxu0 %v81
    %472 = vmatprep.subr.mxu0 0.0
    %473 = vmatpush1.msra.mxu0 %v82
    %474 = vmatprep.subr.mxu0 0.0
    %475 = vmatpush1.msra.mxu0 %v83
    %476 = vmatprep.subr.mxu0 0.0
    %477 = vmatpush1.msra.mxu0 %v84
    %478 = vmatprep.subr.mxu0 0.0
    %479 = vmatpush1.msra.mxu0 %v85
    %480 = vmatprep.subr.mxu0 0.0
    %481 = vmatpush1.msra.mxu0 %v86
    %482 = vmatprep.subr.mxu0 0.0
    %483 = vmatpush1.msra.mxu0 %v87
    %484 = vmatprep.subr.mxu0 0.0
    %485 = vmatpush1.msra.mxu0 %v88
    %486 = vmatprep.subr.mxu0 0.0
    %487 = vmatpush1.msra.mxu0 %v89
    %488 = vmatprep.subr.mxu0 0.0
    %489 = vmatpush1.msra.mxu0 %v90
    %490 = vmatprep.subr.mxu0 0.0
    %491 = vmatpush1.msra.mxu0 %v91
    %492 = vmatprep.subr.mxu0 0.0
    %493 = vmatpush1.msra.mxu0 %v92
    %494 = vmatprep.subr.mxu0 0.0
    %495 = vmatpush1.msra.mxu0 %v93
    %496 = vmatprep.subr.mxu0 0.0
    %497 = vmatpush1.msra.mxu0 %v94
    %498 = vmatprep.subr.mxu0 0.0
    %499 = vmatpush1.msra.mxu0 %v95
    %500 = vmatprep.subr.mxu0 0.0
    %501 = vmatpush1.msra.mxu0 %v96
    %502 = vmatprep.subr.mxu0 0.0
    %503 = vmatpush1.msra.mxu0 %v97
    %504 = vmatprep.subr.mxu0 0.0
    %505 = vmatpush1.msra.mxu0 %v98
    %506 = vmatprep.subr.mxu0 0.0
    %507 = vmatpush1.msra.mxu0 %v99
    %508 = vmatprep.subr.mxu0 0.0
    %509 = vmatpush1.msra.mxu0 %v100
    %510 = vmatprep.subr.mxu0 0.0
    %511 = vmatpush1.msra.mxu0 %v101
    %512 = vmatprep.mubr.f32.mxu0 %v313
    %513 = vmatmul.mubr.f32.gmra.mrb[0].mxu0 %v309
    %v514 = vpop.f32.mrb[0].mxu0
    %v515 = vadd.f32 %v445, %v514
    %v516 = vpop.f32.mrb[0].mxu0
    %517 = vdwg.mxu0
    %518 = vmatprep.subr.mxu0 0.0
    %519 = vmatpush1.msra.mxu0 %v102
    %520 = vmatprep.subr.mxu0 0.0
    %521 = vmatpush1.msra.mxu0 %v103
    %522 = vmatprep.subr.mxu0 0.0
    %523 = vmatpush1.msra.mxu0 %v104
    %524 = vmatprep.subr.mxu0 0.0
    %525 = vmatpush1.msra.mxu0 %v105
    %526 = vmatprep.subr.mxu0 0.0
    %527 = vmatpush1.msra.mxu0 %v106
    %528 = vmatprep.subr.mxu0 0.0
    %529 = vmatpush1.msra.mxu0 %v107
    %530 = vmatprep.subr.mxu0 0.0
    %531 = vmatpush1.msra.mxu0 %v108
    %532 = vmatprep.subr.mxu0 0.0
    %533 = vmatpush1.msra.mxu0 %v109
    %534 = vmatprep.subr.mxu0 0.0
    %535 = vmatpush1.msra.mxu0 %v110
    %536 = vmatprep.subr.mxu0 0.0
    %537 = vmatpush1.msra.mxu0 %v111
    %538 = vmatprep.subr.mxu0 0.0
    %539 = vmatpush1.msra.mxu0 %v112
    %540 = vmatprep.subr.mxu0 0.0
    %541 = vmatpush1.msra.mxu0 %v113
    %542 = vmatprep.subr.mxu0 0.0
    %543 = vmatpush1.msra.mxu0 %v114
    %544 = vmatprep.subr.mxu0 0.0
    %545 = vmatpush1.msra.mxu0 %v115
    %546 = vmatprep.subr.mxu0 0.0
    %547 = vmatpush1.msra.mxu0 %v116
    %548 = vmatprep.subr.mxu0 0.0
    %549 = vmatpush1.msra.mxu0 %v117
    %550 = vmatprep.subr.mxu0 0.0
    %551 = vmatpush1.msra.mxu0 %v118
    %552 = vmatprep.subr.mxu0 0.0
    %553 = vmatpush1.msra.mxu0 %v119
    %554 = vmatprep.subr.mxu0 0.0
    %555 = vmatpush1.msra.mxu0 %v120
    %556 = vmatprep.subr.mxu0 0.0
    %557 = vmatpush1.msra.mxu0 %v121
    %558 = vmatprep.subr.mxu0 0.0
    %559 = vmatpush1.msra.mxu0 %v122
    %560 = vmatprep.subr.mxu0 0.0
    %561 = vmatpush1.msra.mxu0 %v123
    %562 = vmatprep.subr.mxu0 0.0
    %563 = vmatpush1.msra.mxu0 %v124
    %564 = vmatprep.subr.mxu0 0.0
    %565 = vmatpush1.msra.mxu0 %v125
    %566 = vmatprep.subr.mxu0 0.0
    %567 = vmatpush1.msra.mxu0 %v126
    %568 = vmatprep.subr.mxu0 0.0
    %569 = vmatpush1.msra.mxu0 %v127
    %570 = vmatprep.subr.mxu0 0.0
    %571 = vmatpush1.msra.mxu0 %v128
    %572 = vmatprep.subr.mxu0 0.0
    %573 = vmatpush1.msra.mxu0 %v129
    %574 = vmatprep.subr.mxu0 0.0
    %575 = vmatpush1.msra.mxu0 %v130
    %576 = vmatprep.subr.mxu0 0.0
    %577 = vmatpush1.msra.mxu0 %v131
    %578 = vmatprep.subr.mxu0 0.0
    %579 = vmatpush1.msra.mxu0 %v132
    %580 = vmatprep.subr.mxu0 0.0
    %581 = vmatpush1.msra.mxu0 %v133
    %582 = vmatprep.mubr.f32.mxu0 %v321
    %583 = vmatmul.mubr.f32.gmra.mrb[0].mxu0 %v317
    %v584 = vpop.f32.mrb[0].mxu0
    %v585 = vadd.f32 %v515, %v584
    %v586 = vpop.f32.mrb[0].mxu0
    %587 = vdwg.mxu0
    %588 = vmatprep.subr.mxu0 0.0
    %589 = vmatpush1.msra.mxu0 %v134
    %590 = vmatprep.subr.mxu0 0.0
    %591 = vmatpush1.msra.mxu0 %v135
    %592 = vmatprep.subr.mxu0 0.0
    %593 = vmatpush1.msra.mxu0 %v136
    %594 = vmatprep.subr.mxu0 0.0
    %595 = vmatpush1.msra.mxu0 %v137
    %596 = vmatprep.subr.mxu0 0.0
    %597 = vmatpush1.msra.mxu0 %v138
    %598 = vmatprep.subr.mxu0 0.0
    %599 = vmatpush1.msra.mxu0 %v139
    %600 = vmatprep.subr.mxu0 0.0
    %601 = vmatpush1.msra.mxu0 %v140
    %602 = vmatprep.subr.mxu0 0.0
    %603 = vmatpush1.msra.mxu0 %v141
    %604 = vmatprep.subr.mxu0 0.0
    %605 = vmatpush1.msra.mxu0 %v142
    %606 = vmatprep.subr.mxu0 0.0
    %607 = vmatpush1.msra.mxu0 %v143
    %608 = vmatprep.subr.mxu0 0.0
    %609 = vmatpush1.msra.mxu0 %v144
    %610 = vmatprep.subr.mxu0 0.0
    %611 = vmatpush1.msra.mxu0 %v145
    %612 = vmatprep.subr.mxu0 0.0
    %613 = vmatpush1.msra.mxu0 %v146
    %614 = vmatprep.subr.mxu0 0.0
    %615 = vmatpush1.msra.mxu0 %v147
    %616 = vmatprep.subr.mxu0 0.0
    %617 = vmatpush1.msra.mxu0 %v148
    %618 = vmatprep.subr.mxu0 0.0
    %619 = vmatpush1.msra.mxu0 %v149
    %620 = vmatprep.subr.mxu0 0.0
    %621 = vmatpush1.msra.mxu0 %v150
    %622 = vmatprep.subr.mxu0 0.0
    %623 = vmatpush1.msra.mxu0 %v151
    %624 = vmatprep.subr.mxu0 0.0
    %625 = vmatpush1.msra.mxu0 %v152
    %626 = vmatprep.subr.mxu0 0.0
    %627 = vmatpush1.msra.mxu0 %v153
    %628 = vmatprep.subr.mxu0 0.0
    %629 = vmatpush1.msra.mxu0 %v154
    %630 = vmatprep.subr.mxu0 0.0
    %631 = vmatpush1.msra.mxu0 %v155
    %632 = vmatprep.subr.mxu0 0.0
    %633 = vmatpush1.msra.mxu0 %v156
    %634 = vmatprep.subr.mxu0 0.0
    %635 = vmatpush1.msra.mxu0 %v157
    %636 = vmatprep.subr.mxu0 0.0
    %637 = vmatpush1.msra.mxu0 %v158
    %638 = vmatprep.subr.mxu0 0.0
    %639 = vmatpush1.msra.mxu0 %v159
    %640 = vmatprep.subr.mxu0 0.0
    %641 = vmatpush1.msra.mxu0 %v160
    %642 = vmatprep.subr.mxu0 0.0
    %643 = vmatpush1.msra.mxu0 %v161
    %644 = vmatprep.subr.mxu0 0.0
    %645 = vmatpush1.msra.mxu0 %v162
    %646 = vmatprep.subr.mxu0 0.0
    %647 = vmatpush1.msra.mxu0 %v163
    %648 = vmatprep.subr.mxu0 0.0
    %649 = vmatpush1.msra.mxu0 %v164
    %650 = vmatprep.subr.mxu0 0.0
    %651 = vmatpush1.msra.mxu0 %v165
    %652 = vmatprep.mubr.f32.mxu0 %v329
    %653 = vmatmul.mubr.f32.gmra.mrb[0].mxu0 %v325
    %v654 = vpop.f32.mrb[0].mxu0
    %v655 = vadd.f32 %v585, %v654
    %v656 = vpop.f32.mrb[0].mxu0
    %657 = vdwg.mxu0
    %658 = vmatprep.subr.mxu0 0.0
    %659 = vmatpush1.msra.mxu0 %v166
    %660 = vmatprep.subr.mxu0 0.0
    %661 = vmatpush1.msra.mxu0 %v167
    %662 = vmatprep.subr.mxu0 0.0
    %663 = vmatpush1.msra.mxu0 %v168
    %664 = vmatprep.subr.mxu0 0.0
    %665 = vmatpush1.msra.mxu0 %v169
    %666 = vmatprep.subr.mxu0 0.0
    %667 = vmatpush1.msra.mxu0 %v170
    %668 = vmatprep.subr.mxu0 0.0
    %669 = vmatpush1.msra.mxu0 %v171
    %670 = vmatprep.subr.mxu0 0.0
    %671 = vmatpush1.msra.mxu0 %v172
    %672 = vmatprep.subr.mxu0 0.0
    %673 = vmatpush1.msra.mxu0 %v173
    %674 = vmatprep.subr.mxu0 0.0
    %675 = vmatpush1.msra.mxu0 %v174
    %676 = vmatprep.subr.mxu0 0.0
    %677 = vmatpush1.msra.mxu0 %v175
    %678 = vmatprep.subr.mxu0 0.0
    %679 = vmatpush1.msra.mxu0 %v176
    %680 = vmatprep.subr.mxu0 0.0
    %681 = vmatpush1.msra.mxu0 %v177
    %682 = vmatprep.subr.mxu0 0.0
    %683 = vmatpush1.msra.mxu0 %v178
    %684 = vmatprep.subr.mxu0 0.0
    %685 = vmatpush1.msra.mxu0 %v179
    %686 = vmatprep.subr.mxu0 0.0
    %687 = vmatpush1.msra.mxu0 %v180
    %688 = vmatprep.subr.mxu0 0.0
    %689 = vmatpush1.msra.mxu0 %v181
    %690 = vmatprep.subr.mxu0 0.0
    %691 = vmatpush1.msra.mxu0 %v182
    %692 = vmatprep.subr.mxu0 0.0
    %693 = vmatpush1.msra.mxu0 %v183
    %694 = vmatprep.subr.mxu0 0.0
    %695 = vmatpush1.msra.mxu0 %v184
    %696 = vmatprep.subr.mxu0 0.0
    %697 = vmatpush1.msra.mxu0 %v185
    %698 = vmatprep.subr.mxu0 0.0
    %699 = vmatpush1.msra.mxu0 %v186
    %700 = vmatprep.subr.mxu0 0.0
    %701 = vmatpush1.msra.mxu0 %v187
    %702 = vmatprep.subr.mxu0 0.0
    %703 = vmatpush1.msra.mxu0 %v188
    %704 = vmatprep.subr.mxu0 0.0
    %705 = vmatpush1.msra.mxu0 %v189
    %706 = vmatprep.subr.mxu0 0.0
    %707 = vmatpush1.msra.mxu0 %v190
    %708 = vmatprep.subr.mxu0 0.0
    %709 = vmatpush1.msra.mxu0 %v191
    %710 = vmatprep.subr.mxu0 0.0
    %711 = vmatpush1.msra.mxu0 %v192
    %712 = vmatprep.subr.mxu0 0.0
    %713 = vmatpush1.msra.mxu0 %v193
    %714 = vmatprep.subr.mxu0 0.0
    %715 = vmatpush1.msra.mxu0 %v194
    %716 = vmatprep.subr.mxu0 0.0
    %717 = vmatpush1.msra.mxu0 %v195
    %718 = vmatprep.subr.mxu0 0.0
    %719 = vmatpush1.msra.mxu0 %v196
    %720 = vmatprep.subr.mxu0 0.0
    %721 = vmatpush1.msra.mxu0 %v197
    %722 = vmatprep.mubr.f32.mxu0 %v337
    %723 = vmatmul.mubr.f32.gmra.mrb[0].mxu0 %v333
    %v724 = vpop.f32.mrb[0].mxu0
    %v725 = vadd.f32 %v655, %v724
    %v726 = vpop.f32.mrb[0].mxu0
    %727 = vdwg.mxu0
    %728 = vmatprep.subr.mxu0 0.0
    %729 = vmatpush1.msra.mxu0 %v198
    %730 = vmatprep.subr.mxu0 0.0
    %731 = vmatpush1.msra.mxu0 %v199
    %732 = vmatprep.subr.mxu0 0.0
    %733 = vmatpush1.msra.mxu0 %v200
    %734 = vmatprep.subr.mxu0 0.0
    %735 = vmatpush1.msra.mxu0 %v201
    %736 = vmatprep.subr.mxu0 0.0
    %737 = vmatpush1.msra.mxu0 %v202
    %738 = vmatprep.subr.mxu0 0.0
    %739 = vmatpush1.msra.mxu0 %v203
    %740 = vmatprep.subr.mxu0 0.0
    %741 = vmatpush1.msra.mxu0 %v204
    %742 = vmatprep.subr.mxu0 0.0
    %743 = vmatpush1.msra.mxu0 %v205
    %744 = vmatprep.subr.mxu0 0.0
    %745 = vmatpush1.msra.mxu0 %v206
    %746 = vmatprep.subr.mxu0 0.0
    %747 = vmatpush1.msra.mxu0 %v207
    %748 = vmatprep.subr.mxu0 0.0
    %749 = vmatpush1.msra.mxu0 %v208
    %750 = vmatprep.subr.mxu0 0.0
    %751 = vmatpush1.msra.mxu0 %v209
    %752 = vmatprep.subr.mxu0 0.0
    %753 = vmatpush1.msra.mxu0 %v210
    %754 = vmatprep.subr.mxu0 0.0
    %755 = vmatpush1.msra.mxu0 %v211
    %756 = vmatprep.subr.mxu0 0.0
    %757 = vmatpush1.msra.mxu0 %v212
    %758 = vmatprep.subr.mxu0 0.0
    %759 = vmatpush1.msra.mxu0 %v213
    %760 = vmatprep.subr.mxu0 0.0
    %761 = vmatpush1.msra.mxu0 %v214
    %762 = vmatprep.subr.mxu0 0.0
    %763 = vmatpush1.msra.mxu0 %v215
    %764 = vmatprep.subr.mxu0 0.0
    %765 = vmatpush1.msra.mxu0 %v216
    %766 = vmatprep.subr.mxu0 0.0
    %767 = vmatpush1.msra.mxu0 %v217
    %768 = vmatprep.subr.mxu0 0.0
    %769 = vmatpush1.msra.mxu0 %v218
    %770 = vmatprep.subr.mxu0 0.0
    %771 = vmatpush1.msra.mxu0 %v219
    %772 = vmatprep.subr.mxu0 0.0
    %773 = vmatpush1.msra.mxu0 %v220
    %774 = vmatprep.subr.mxu0 0.0
    %775 = vmatpush1.msra.mxu0 %v221
    %776 = vmatprep.subr.mxu0 0.0
    %777 = vmatpush1.msra.mxu0 %v222
    %778 = vmatprep.subr.mxu0 0.0
    %779 = vmatpush1.msra.mxu0 %v223
    %780 = vmatprep.subr.mxu0 0.0
    %781 = vmatpush1.msra.mxu0 %v224
    %782 = vmatprep.subr.mxu0 0.0
    %783 = vmatpush1.msra.mxu0 %v225
    %784 = vmatprep.subr.mxu0 0.0
    %785 = vmatpush1.msra.mxu0 %v226
    %786 = vmatprep.subr.mxu0 0.0
    %787 = vmatpush1.msra.mxu0 %v227
    %788 = vmatprep.subr.mxu0 0.0
    %789 = vmatpush1.msra.mxu0 %v228
    %790 = vmatprep.subr.mxu0 0.0
    %791 = vmatpush1.msra.mxu0 %v229
    %792 = vmatprep.mubr.f32.mxu0 %v345
    %793 = vmatmul.mubr.f32.gmra.mrb[0].mxu0 %v341
    %v794 = vpop.f32.mrb[0].mxu0
    %v795 = vadd.f32 %v725, %v794
    %v796 = vpop.f32.mrb[0].mxu0
    %797 = vdwg.mxu0
    %798 = vmatprep.subr.mxu0 0.0
    %799 = vmatpush1.msra.mxu0 %v230
    %800 = vmatprep.subr.mxu0 0.0
    %801 = vmatpush1.msra.mxu0 %v231
    %802 = vmatprep.subr.mxu0 0.0
    %803 = vmatpush1.msra.mxu0 %v232
    %804 = vmatprep.subr.mxu0 0.0
    %805 = vmatpush1.msra.mxu0 %v233
    %806 = vmatprep.subr.mxu0 0.0
    %807 = vmatpush1.msra.mxu0 %v234
    %808 = vmatprep.subr.mxu0 0.0
    %809 = vmatpush1.msra.mxu0 %v235
    %810 = vmatprep.subr.mxu0 0.0
    %811 = vmatpush1.msra.mxu0 %v236
    %812 = vmatprep.subr.mxu0 0.0
    %813 = vmatpush1.msra.mxu0 %v237
    %814 = vmatprep.subr.mxu0 0.0
    %815 = vmatpush1.msra.mxu0 %v238
    %816 = vmatprep.subr.mxu0 0.0
    %817 = vmatpush1.msra.mxu0 %v239
    %818 = vmatprep.subr.mxu0 0.0
    %819 = vmatpush1.msra.mxu0 %v240
    %820 = vmatprep.subr.mxu0 0.0
    %821 = vmatpush1.msra.mxu0 %v241
    %822 = vmatprep.subr.mxu0 0.0
    %823 = vmatpush1.msra.mxu0 %v242
    %824 = vmatprep.subr.mxu0 0.0
    %825 = vmatpush1.msra.mxu0 %v243
    %826 = vmatprep.subr.mxu0 0.0
    %827 = vmatpush1.msra.mxu0 %v244
    %828 = vmatprep.subr.mxu0 0.0
    %829 = vmatpush1.msra.mxu0 %v245
    %830 = vmatprep.subr.mxu0 0.0
    %831 = vmatpush1.msra.mxu0 %v246
    %832 = vmatprep.subr.mxu0 0.0
    %833 = vmatpush1.msra.mxu0 %v247
    %834 = vmatprep.subr.mxu0 0.0
    %835 = vmatpush1.msra.mxu0 %v248
    %836 = vmatprep.subr.mxu0 0.0
    %837 = vmatpush1.msra.mxu0 %v249
    %838 = vmatprep.subr.mxu0 0.0
    %839 = vmatpush1.msra.mxu0 %v250
    %840 = vmatprep.subr.mxu0 0.0
    %841 = vmatpush1.msra.mxu0 %v251
    %842 = vmatprep.subr.mxu0 0.0
    %843 = vmatpush1.msra.mxu0 %v252
    %844 = vmatprep.subr.mxu0 0.0
    %845 = vmatpush1.msra.mxu0 %v253
    %846 = vmatprep.subr.mxu0 0.0
    %847 = vmatpush1.msra.mxu0 %v254
    %848 = vmatprep.subr.mxu0 0.0
    %849 = vmatpush1.msra.mxu0 %v255
    %850 = vmatprep.subr.mxu0 0.0
    %851 = vmatpush1.msra.mxu0 %v256
    %852 = vmatprep.subr.mxu0 0.0
    %853 = vmatpush1.msra.mxu0 %v257
    %854 = vmatprep.subr.mxu0 0.0
    %855 = vmatpush1.msra.mxu0 %v258
    %856 = vmatprep.subr.mxu0 0.0
    %857 = vmatpush1.msra.mxu0 %v259
    %858 = vmatprep.subr.mxu0 0.0
    %859 = vmatpush1.msra.mxu0 %v260
    %860 = vmatprep.subr.mxu0 0.0
    %861 = vmatpush1.msra.mxu0 %v261
    %862 = vmatprep.mubr.f32.mxu0 %v353
    %863 = vmatmul.mubr.f32.gmra.mrb[0].mxu0 %v349
    %v864 = vpop.f32.mrb[0].mxu0
    %v865 = vadd.f32 %v795, %v864
    %v866 = vpop.f32.mrb[0].mxu0
    %867 = vdwg.mxu0
    %868 = vmatprep.subr.mxu0 0.0
    %869 = vmatpush1.msra.mxu0 %v262
    %870 = vmatprep.subr.mxu0 0.0
    %871 = vmatpush1.msra.mxu0 %v263
    %872 = vmatprep.subr.mxu0 0.0
    %873 = vmatpush1.msra.mxu0 %v264
    %874 = vmatprep.subr.mxu0 0.0
    %875 = vmatpush1.msra.mxu0 %v265
    %876 = vmatprep.subr.mxu0 0.0
    %877 = vmatpush1.msra.mxu0 %v266
    %878 = vmatprep.subr.mxu0 0.0
    %879 = vmatpush1.msra.mxu0 %v267
    %880 = vmatprep.subr.mxu0 0.0
    %881 = vmatpush1.msra.mxu0 %v268
    %882 = vmatprep.subr.mxu0 0.0
    %883 = vmatpush1.msra.mxu0 %v269
    %884 = vmatprep.subr.mxu0 0.0
    %885 = vmatpush1.msra.mxu0 %v270
    %886 = vmatprep.subr.mxu0 0.0
    %887 = vmatpush1.msra.mxu0 %v271
    %888 = vmatprep.subr.mxu0 0.0
    %889 = vmatpush1.msra.mxu0 %v272
    %890 = vmatprep.subr.mxu0 0.0
    %891 = vmatpush1.msra.mxu0 %v273
    %892 = vmatprep.subr.mxu0 0.0
    %893 = vmatpush1.msra.mxu0 %v274
    %894 = vmatprep.subr.mxu0 0.0
    %895 = vmatpush1.msra.mxu0 %v275
    %896 = vmatprep.subr.mxu0 0.0
    %897 = vmatpush1.msra.mxu0 %v276
    %898 = vmatprep.subr.mxu0 0.0
    %899 = vmatpush1.msra.mxu0 %v277
    %900 = vmatprep.subr.mxu0 0.0
    %901 = vmatpush1.msra.mxu0 %v278
    %902 = vmatprep.subr.mxu0 0.0
    %903 = vmatpush1.msra.mxu0 %v279
    %904 = vmatprep.subr.mxu0 0.0
    %905 = vmatpush1.msra.mxu0 %v280
    %906 = vmatprep.subr.mxu0 0.0
    %907 = vmatpush1.msra.mxu0 %v281
    %908 = vmatprep.subr.mxu0 0.0
    %909 = vmatpush1.msra.mxu0 %v282
    %910 = vmatprep.subr.mxu0 0.0
    %911 = vmatpush1.msra.mxu0 %v283
    %912 = vmatprep.subr.mxu0 0.0
    %913 = vmatpush1.msra.mxu0 %v284
    %914 = vmatprep.subr.mxu0 0.0
    %915 = vmatpush1.msra.mxu0 %v285
    %916 = vmatprep.subr.mxu0 0.0
    %917 = vmatpush1.msra.mxu0 %v286
    %918 = vmatprep.subr.mxu0 0.0
    %919 = vmatpush1.msra.mxu0 %v287
    %920 = vmatprep.subr.mxu0 0.0
    %921 = vmatpush1.msra.mxu0 %v288
    %922 = vmatprep.subr.mxu0 0.0
    %923 = vmatpush1.msra.mxu0 %v289
    %924 = vmatprep.subr.mxu0 0.0
    %925 = vmatpush1.msra.mxu0 %v290
    %926 = vmatprep.subr.mxu0 0.0
    %927 = vmatpush1.msra.mxu0 %v291
    %928 = vmatprep.subr.mxu0 0.0
    %929 = vmatpush1.msra.mxu0 %v292
    %930 = vmatprep.subr.mxu0 0.0
    %931 = vmatpush1.msra.mxu0 %v293
    %932 = vmatprep.mubr.f32.mxu0 %v361
    %933 = vmatmul.mubr.f32.gmra.mrb[0].mxu0 %v357
    %v934 = vpop.f32.mrb[0].mxu0
    %v935 = vadd.f32 %v865, %v934
    %v936 = vpop.f32.mrb[0].mxu0
    %937 = vdwg.mxu0
    %v938 = vmul.f32 %v935, 0.00390625
    %vm939 = vcmask 57344
    %940 = vst.msk [vmem:[#allocation7] sm:$0x1] %vm939, %v938
    // Predicated region
    $region18: #{tpu_custom_call.1} parent=1 // pred_check
      _
    $region19: #{tpu_custom_call.1} parent=1 // pred_check_branch
      %942 = sbr.rel (0) target = $region21
    $region20: #{tpu_custom_call.1} parent=1 // pred_region
      %s944 = ssub.s32 16, 16
      %945 = vsyncadd [#allocation4], %s944
      %s947 = sshll.u32 [#allocation7], 4
      %s948 = int_to_ptr.vmem [resolvable:$true] %s947
      %950 = dma.vmem_to_hbm [thread:$0]  %s948, 16, %s2, [#allocation4]
    $region21: #{tpu_custom_call.1} parent=1 // pred_fallthru
      _
    // Predicated region
    $region22: #{tpu_custom_call.1} parent=1 // pred_check
      _
    $region23: #{tpu_custom_call.1} parent=1 // pred_check_branch
      %952 = sbr.rel (0) target = $region25
    $region24: #{tpu_custom_call.1} parent=1 // pred_region
      %953 = dma.done [#allocation4], 16
    $region25: #{tpu_custom_call.1} parent=1 // pred_fallthru
      _
    %954 = vsyncpa [#allocation3], 1
    %955 = vsyncpa [#allocation6], 1
    %956 = vsyncpa [#allocation4], 1

</llo_original>
